<compile_context>
chip_gen: v7x
topology: tpu7x:2x2x1
jax: 0.10.0
libtpu: 0.0.40
codegen_flags: <defaults>
</compile_context>

<pallas_src>
import functools

import jax
import jax.numpy as jnp
from jax import lax
from jax.experimental import pallas as pl
from jax.experimental.pallas import tpu as pltpu


# ----------------------------------------------------------------------------
# Kernel A (fused): camera-optimizer pose norms + per-key eval-metric means
# Fixed-overhead kernel (<8 KiB of data): raw inputs, single (8,128) store.
# ----------------------------------------------------------------------------
def _train_scalars_kernel(pose_ref, metrics_ref, out_ref, *, num_images: int):
    # pose_ref: [n, 6] f32; cols 0..2 = translation, 3..5 = rotation.
    p = pose_ref[...].astype(jnp.float32)
    sq = p * p
    col = lax.broadcasted_iota(jnp.int32, sq.shape, 1)
    trans_sq = jnp.sum(jnp.where(col < 3, sq, 0.0), keepdims=True)   # (1,1)
    rot_sq = jnp.sum(jnp.where(col >= 3, sq, 0.0), keepdims=True)    # (1,1)
    trans_n = jnp.sqrt(trans_sq)
    rot_n = jnp.sqrt(rot_sq)

    # metrics_ref: [k, m] f32 (keys x images); mean over images.
    mm = metrics_ref[...].astype(jnp.float32)
    k = mm.shape[0]
    means_k = jnp.sum(mm, axis=1, keepdims=True) * (1.0 / float(num_images))  # (k,1)

    # One-hot "transpose": place key j's mean into lane j of a (1,128) row
    # (k is tiny, so this (k,128) intermediate is a couple of vregs of VPU work).
    key_ids = lax.broadcasted_iota(jnp.int32, (k, 128), 0)
    lane_ids = lax.broadcasted_iota(jnp.int32, (k, 128), 1)
    means_row = jnp.sum(jnp.where(key_ids == lane_ids, means_k, 0.0),
                        axis=0, keepdims=True)                        # (1,128)

    # Single full-vreg (8,128) store:
    #   row 0: lane 0 = translation norm, lane 1 = rotation norm
    #   row 1: lanes 0..k-1 = per-key means
    row8 = lax.broadcasted_iota(jnp.int32, (8, 128), 0)
    lane8 = lax.broadcasted_iota(jnp.int32, (8, 128), 1)
    scalars_row = jnp.where(lane8 == 0, trans_n,
                            jnp.where(lane8 == 1, rot_n, 0.0))
    out_ref[...] = jnp.where(row8 == 0, scalars_row,
                             jnp.where(row8 == 1,
                                       jnp.broadcast_to(means_row, (8, 128)),
                                       0.0))


def train_scalar_metrics(pose_adjustment: jax.Array, metrics_matrix: jax.Array):
    """Returns (camera_opt_translation, camera_opt_rotation, per_key_means)."""
    n, six = pose_adjustment.shape
    assert six == 6
    k, m = metrics_matrix.shape
    assert k <= 128, "more metric keys than lanes; add a grid if this grows"

    kernel = functools.partial(_train_scalars_kernel, num_images=m)
    out = pl.pallas_call(
        kernel,
        out_shape=jax.ShapeDtypeStruct((8, 128), jnp.float32),
        in_specs=[
            pl.BlockSpec((n, six), lambda: (0, 0)),   # full-array block, no host pad
            pl.BlockSpec((k, m), lambda: (0, 0)),     # full-array block, no host pad
        ],
        out_specs=pl.BlockSpec((8, 128), lambda: (0, 0)),
    )(pose_adjustment, metrics_matrix)
    return out[0, 0], out[0, 1], out[1, :k]


# ----------------------------------------------------------------------------
# Kernel B: get_visibility_mask final thresholding
#   coarse_mask = (coarse_mask.grad > 1e-4).float()
# Pure HBM-bandwidth-bound elementwise op; tiled against a VMEM budget.
# ----------------------------------------------------------------------------
def _visibility_threshold_kernel(g_ref, o_ref):
    o_ref[...] = (g_ref[...] > 1e-4).astype(o_ref.dtype)


def _sublane_unit(dtype) -> int:
    """Sublane rows per fully-packed vreg for this dtype (min 8)."""
    return max(8, 32 // jnp.dtype(dtype).itemsize)


def _pick_block(total: int, unit: int, cap_elems: int) -> int:
    """Full dim if it fits under the cap, else the largest multiple of `unit`
    that does (edge tiles handled by a cdiv grid — exact for elementwise)."""
    if total <= cap_elems:
        return total
    return max(unit, (cap_elems // unit) * unit)


def visibility_mask_from_grad(grad_grid: jax.Array, *,
                              out_dtype=jnp.bfloat16,
                              vmem_budget_bytes: int = 12 * 1024 * 1024,
                              buffer_count: int = 2,
                              donate_input: bool = False,
                              core_parallel: bool = False):
    """grad_grid: [R, R*R] (flattened (1,1,R,R,R) gradient grid).

    Output values are exactly 0.0 / 1.0, so bf16 (default) is bit-exact for
    any downstream multiply while halving the HBM writeback; pass
    out_dtype=jnp.float32 to match the torch .float() dtype contract exactly.
    The 12 MiB double-buffered budget + 32 MiB vmem_limit is safe on every
    generation, including v7x's 64 MiB physical / 32 MiB scoped VMEM.
    """
    rows, cols = grad_grid.shape
    in_b = grad_grid.dtype.itemsize
    out_b = jnp.dtype(out_dtype).itemsize
    # Pipeline bytes per tile element: `buffer_count` buffers each for the
    # input and the output ref (honest accounting if buffering is deepened).
    bpe = buffer_count * (in_b + out_b)

    # Sublane tile unit must give fully-packed vregs for BOTH dtypes
    # (16 for f32-in / bf16-out -> unmasked packed stores; matters most on
    # v5e's single vector-store slot).
    row_unit = max(_sublane_unit(grad_grid.dtype), _sublane_unit(out_dtype))

    tile_elems = max(1, vmem_budget_bytes // bpe)
    if rows * cols <= tile_elems:
        row_block, col_block = rows, cols            # single full block
    else:
        # Lane-dense first (large multiple of 128 -> unmasked vst on the
        # writeback path), then fill the remaining budget with sublane rows.
        col_block = _pick_block(cols, 128, max(128, tile_elems // row_unit))
        row_block = _pick_block(rows, row_unit,
                                max(row_unit, tile_elems // col_block))

    grid = (pl.cdiv(rows, row_block), pl.cdiv(cols, col_block))

    cost = pl.CostEstimate(
        flops=rows * cols,
        transcendentals=0,
        bytes_accessed=rows * cols * (in_b + out_b),
    )

    extra = {}
    if donate_input and jnp.dtype(out_dtype) == grad_grid.dtype:
        extra["input_output_aliases"] = {0: 0}   # overwrite the grad grid in place

    # On v7x set core_parallel=True to shard the leading (row) grid axis across
    # both TensorCores and roughly double DMA issue capacity toward HBM.
    # TODO(synk): flip the default once profiled on v7x hardware.
    lead_sem = pltpu.CORE_PARALLEL if core_parallel else pltpu.PARALLEL

    return pl.pallas_call(
        _visibility_threshold_kernel,
        out_shape=jax.ShapeDtypeStruct((rows, cols), out_dtype),
        grid=grid,
        in_specs=[pl.BlockSpec((row_block, col_block), lambda i, j: (i, j))],
        out_specs=pl.BlockSpec((row_block, col_block), lambda i, j: (i, j)),
        compiler_params=pltpu.CompilerParams(
            dimension_semantics=(lead_sem, pltpu.PARALLEL),
            vmem_limit_bytes=32 * 1024 * 1024,   # explicit headroom on every gen
        ),
        cost_estimate=cost,
        **extra,
    )(grad_grid)


# TODO(synk): DataManager.next_train / Model.get_outputs / get_loss_dict are
# abstract interfaces with no tensor definition at this scope, and the
# grid_sample backward (trilinear scatter-add into the 512^3 mask) has no
# clean Pallas equivalent here — only the pipeline-level math above is lowered.


if __name__ == "__main__":
    key = jax.random.PRNGKey(0)
    k_pose, k_metrics, k_grad, k_grad2 = jax.random.split(key, 4)

    # Deterministic small inputs consistent with the module.
    num_cameras = 8
    pose_adjustment = 0.01 * jax.random.normal(k_pose, (num_cameras, 6), jnp.float32)

    num_keys, num_images = 4, 8
    metrics_matrix = jax.random.uniform(k_metrics, (num_keys, num_images), jnp.float32)

    R = 32  # coarse_grid_resolution stand-in (torch default is 512)
    grad_grid = 2e-4 * jax.random.uniform(k_grad, (R, R * R), jnp.float32)
    # Non-power-of-two grid to exercise cdiv edge tiles in the tiler.
    R2 = 40
    grad_grid_odd = 2e-4 * jax.random.uniform(k_grad2, (R2, R2 * R2), jnp.float32)

    # Run kernels.
    trans_norm, rot_norm, key_means = train_scalar_metrics(pose_adjustment, metrics_matrix)
    vis_mask = visibility_mask_from_grad(grad_grid)                    # single-block path
    vis_mask_tiled = visibility_mask_from_grad(grad_grid,               # force the tiled path
                                               vmem_budget_bytes=64 * 1024)
    vis_mask_edge = visibility_mask_from_grad(grad_grid_odd,            # non-dividing edge tiles
                                              vmem_budget_bytes=64 * 1024)
    vis_mask_f32 = visibility_mask_from_grad(grad_grid, out_dtype=jnp.float32)

    jax.block_until_ready((trans_norm, rot_norm, key_means,
                           vis_mask, vis_mask_tiled, vis_mask_edge, vis_mask_f32))

    # Reference checks (plain JAX == torch semantics).
    ref_t = jnp.sqrt(jnp.sum(pose_adjustment[:, :3] ** 2))
    ref_r = jnp.sqrt(jnp.sum(pose_adjustment[:, 3:] ** 2))
    ref_means = jnp.mean(metrics_matrix, axis=1)
    ref_mask = (grad_grid > 1e-4).astype(jnp.float32)
    ref_mask_odd = (grad_grid_odd > 1e-4).astype(jnp.float32)

    assert jnp.allclose(trans_norm, ref_t, rtol=1e-5, atol=1e-6)
    assert jnp.allclose(rot_norm, ref_r, rtol=1e-5, atol=1e-6)
    assert jnp.allclose(key_means, ref_means, rtol=1e-5, atol=1e-6)
    assert jnp.array_equal(vis_mask.astype(jnp.float32), ref_mask)
    assert jnp.array_equal(vis_mask_tiled.astype(jnp.float32), ref_mask)
    assert jnp.array_equal(vis_mask_edge.astype(jnp.float32), ref_mask_odd)
    assert jnp.array_equal(vis_mask_f32, ref_mask)

    print("KERNEL_OK")
</pallas_src>

<mosaic_0001>
module attributes {stable_mosaic.version = 11 : i64} {
  func.func @_train_scalars_kernel(%arg0: memref<8x6xf32, #tpu.memory_space<vmem>>, %arg1: memref<4x8xf32, #tpu.memory_space<vmem>>, %arg2: memref<8x128xf32, #tpu.memory_space<vmem>>) attributes {dimension_semantics = [], scalar_prefetch = 0 : i64, scratch_operands = 0 : i64, tpu.core_type = #tpu.core_type<tc>} {
    %c0 = arith.constant 0 : index
    %c0_0 = arith.constant 0 : index
    %0 = vector.load %arg0[%c0, %c0_0] : memref<8x6xf32, #tpu.memory_space<vmem>>, vector<8x6xf32>
    %1 = arith.mulf %0, %0 : vector<8x6xf32>
    %2 = tpu.iota {dimensions = array<i32: 1>} : vector<8x6xi32>
    %c3_i32 = arith.constant 3 : i32
    %3 = vector.broadcast %c3_i32 : i32 to vector<8x6xi32>
    %4 = arith.cmpi slt, %2, %3 : vector<8x6xi32>
    %cst = arith.constant 0.000000e+00 : f32
    %5 = vector.broadcast %cst : f32 to vector<8x6xf32>
    %6 = arith.select %4, %1, %5 : vector<8x6xi1>, vector<8x6xf32>
    %7 = vector.shape_cast %6 : vector<8x6xf32> to vector<1x8x6xf32>
    %cst_1 = arith.constant dense<0.000000e+00> : vector<1xf32>
    %8 = vector.multi_reduction <add>, %7, %cst_1 [1, 2] : vector<1x8x6xf32> to vector<1xf32>
    %9 = vector.shape_cast %8 : vector<1xf32> to vector<1x1x1xf32>
    %10 = vector.extract %9[0, 0, 0] : f32 from vector<1x1x1xf32>
    %11 = vector.broadcast %10 : f32 to vector<1x1xf32>
    %c3_i32_2 = arith.constant 3 : i32
    %12 = vector.broadcast %c3_i32_2 : i32 to vector<8x6xi32>
    %13 = arith.cmpi sge, %2, %12 : vector<8x6xi32>
    %cst_3 = arith.constant 0.000000e+00 : f32
    %14 = vector.broadcast %cst_3 : f32 to vector<8x6xf32>
    %15 = arith.select %13, %1, %14 : vector<8x6xi1>, vector<8x6xf32>
    %16 = vector.shape_cast %15 : vector<8x6xf32> to vector<1x8x6xf32>
    %cst_4 = arith.constant dense<0.000000e+00> : vector<1xf32>
    %17 = vector.multi_reduction <add>, %16, %cst_4 [1, 2] : vector<1x8x6xf32> to vector<1xf32>
    %18 = vector.shape_cast %17 : vector<1xf32> to vector<1x1x1xf32>
    %19 = vector.extract %18[0, 0, 0] : f32 from vector<1x1x1xf32>
    %20 = vector.broadcast %19 : f32 to vector<1x1xf32>
    %21 = math.sqrt %11 : vector<1x1xf32>
    %22 = math.sqrt %20 : vector<1x1xf32>
    %c0_5 = arith.constant 0 : index
    %c0_6 = arith.constant 0 : index
    %23 = vector.load %arg1[%c0_5, %c0_6] : memref<4x8xf32, #tpu.memory_space<vmem>>, vector<4x8xf32>
    %cst_7 = arith.constant dense<0.000000e+00> : vector<4xf32>
    %24 = vector.multi_reduction <add>, %23, %cst_7 [1] : vector<4x8xf32> to vector<4xf32>
    %25 = vector.shape_cast %24 : vector<4xf32> to vector<4x1xf32>
    %cst_8 = arith.constant 1.250000e-01 : f32
    %26 = vector.broadcast %cst_8 : f32 to vector<4x1xf32>
    %27 = arith.mulf %25, %26 : vector<4x1xf32>
    %28 = tpu.iota {dimensions = array<i32: 0>} : vector<4x128xi32>
    %29 = tpu.iota {dimensions = array<i32: 1>} : vector<4x128xi32>
    %30 = arith.cmpi eq, %28, %29 : vector<4x128xi32>
    %cst_9 = arith.constant 0.000000e+00 : f32
    %31 = vector.shape_cast %27 : vector<4x1xf32> to vector<4x1xf32>
    %32 = vector.broadcast %31 : vector<4x1xf32> to vector<4x128xf32>
    %33 = vector.broadcast %cst_9 : f32 to vector<4x128xf32>
    %34 = arith.select %30, %32, %33 : vector<4x128xi1>, vector<4x128xf32>
    %cst_10 = arith.constant dense<0.000000e+00> : vector<128xf32>
    %35 = vector.multi_reduction <add>, %34, %cst_10 [0] : vector<4x128xf32> to vector<128xf32>
    %36 = vector.shape_cast %35 : vector<128xf32> to vector<1x128xf32>
    %37 = tpu.iota {dimensions = array<i32: 0>} : vector<8x128xi32>
    %38 = tpu.iota {dimensions = array<i32: 1>} : vector<8x128xi32>
    %c0_i32 = arith.constant 0 : i32
    %39 = vector.broadcast %c0_i32 : i32 to vector<8x128xi32>
    %40 = arith.cmpi eq, %38, %39 : vector<8x128xi32>
    %c1_i32 = arith.constant 1 : i32
    %41 = vector.broadcast %c1_i32 : i32 to vector<8x128xi32>
    %42 = arith.cmpi eq, %38, %41 : vector<8x128xi32>
    %cst_11 = arith.constant 0.000000e+00 : f32
    %43 = vector.shape_cast %22 : vector<1x1xf32> to vector<1x1xf32>
    %44 = vector.broadcast %43 : vector<1x1xf32> to vector<8x128xf32>
    %45 = vector.broadcast %cst_11 : f32 to vector<8x128xf32>
    %46 = arith.select %42, %44, %45 : vector<8x128xi1>, vector<8x128xf32>
    %47 = vector.shape_cast %21 : vector<1x1xf32> to vector<1x1xf32>
    %48 = vector.broadcast %47 : vector<1x1xf32> to vector<8x128xf32>
    %49 = arith.select %40, %48, %46 : vector<8x128xi1>, vector<8x128xf32>
    %c0_i32_12 = arith.constant 0 : i32
    %50 = vector.broadcast %c0_i32_12 : i32 to vector<8x128xi32>
    %51 = arith.cmpi eq, %37, %50 : vector<8x128xi32>
    %c1_i32_13 = arith.constant 1 : i32
    %52 = vector.broadcast %c1_i32_13 : i32 to vector<8x128xi32>
    %53 = arith.cmpi eq, %37, %52 : vector<8x128xi32>
    %54 = vector.shape_cast %36 : vector<1x128xf32> to vector<1x128xf32>
    %55 = vector.broadcast %54 : vector<1x128xf32> to vector<8x128xf32>
    %cst_14 = arith.constant 0.000000e+00 : f32
    %56 = vector.broadcast %cst_14 : f32 to vector<8x128xf32>
    %57 = arith.select %53, %55, %56 : vector<8x128xi1>, vector<8x128xf32>
    %58 = arith.select %51, %49, %57 : vector<8x128xi1>, vector<8x128xf32>
    %c0_15 = arith.constant 0 : index
    %c0_16 = arith.constant 0 : index
    %59 = vector.load %arg2[%c0_15, %c0_16] : memref<8x128xf32, #tpu.memory_space<vmem>>, vector<8x128xf32>
    tpu.vector_store %arg2[%c0_15, %c0_16], %58 {strides = array<i32>} : memref<8x128xf32, #tpu.memory_space<vmem>>, vector<8x128xf32>,
    return
  }
}

</mosaic_0001>

<llo_original>
// kernel: tpu_custom_call.1
$region0: #{tpu_custom_call.1}
  #allocation0 [shape = 'u32[]', space=smem, size = 0x4, offset = 0x4, fixed_abs, tag = 'smem constant byte address 0x4 - core index']
  #allocation1 [shape = 'u32[144,128]{1,0:T(1,128)}', space=vmem, size = 0x12000, scoped, tag = 'internal scratch']
  %s0 = inlined_call_operand.hbm [shape: f32[8,6], index: 0, kind: input, shape index: {}]
  %s1 = inlined_call_operand.hbm [shape: f32[4,8], index: 1, kind: input, shape index: {}]
  %s2 = inlined_call_operand.hbm [shape: f32[8,128], index: 2, kind: output, shape index: {}]
  %s3 = sld [smem:[#allocation0]]
  $region26: #{tpu_custom_call.1} parent=0
    _
  %s5 = ssub.s32 1, %s3
  %s6 = scalar_select 0, %s5, %s3
  $region1: #{tpu_custom_call.1} parent=0
    #allocation2 [shape = 'u8[4096]{0}', space=vmem, size = 0x1000, scoped, tag = 'input window, operand 0, single buffered']
    #allocation3 [shape = 's32[1]{0}', space=sflag, size = 0x4, scoped, tag = 'scoped memory for tpu_custom_call.1']
    #allocation4 [shape = 's32[1]{0}', space=sflag, size = 0x4, scoped, tag = 'scoped memory for tpu_custom_call.1']
    #allocation5 [shape = 'u8[2048]{0}', space=vmem, size = 0x800, scoped, tag = 'input window, operand 1, single buffered']
    #allocation6 [shape = 's32[1]{0}', space=sflag, size = 0x4, scoped, tag = 'scoped memory for tpu_custom_call.1']
    #allocation7 [shape = 'u8[4096]{0}', space=vmem, size = 0x1000, scoped, tag = 'output window, operand 0, single buffered']
    %7 = vsyncpa [#allocation3], 0
    %8 = vsyncpa [#allocation6], 0
    %9 = vsyncpa [#allocation4], 0
    // Predicated region
    $region2: #{tpu_custom_call.1} parent=1 // pred_check
      _
    $region3: #{tpu_custom_call.1} parent=1 // pred_check_branch
      %11 = sbr.rel (0) target = $region5
    $region4: #{tpu_custom_call.1} parent=1 // pred_region
      %s13 = ssub.s32 128, 128
      %14 = vsyncadd [#allocation3], %s13
      %s16 = sshll.u32 [#allocation2], 4
      %s17 = int_to_ptr.vmem [resolvable:$true] %s16
      %19 = dma.hbm_to_vmem [thread:$0]  %s0, 128, %s17, [#allocation3]
    $region5: #{tpu_custom_call.1} parent=1 // pred_fallthru
      _
    // Predicated region
    $region6: #{tpu_custom_call.1} parent=1 // pred_check
      _
    $region7: #{tpu_custom_call.1} parent=1 // pred_check_branch
      %21 = sbr.rel (0) target = $region9
    $region8: #{tpu_custom_call.1} parent=1 // pred_region
      %s23 = ssub.s32 64, 64
      %24 = vsyncadd [#allocation6], %s23
      %s26 = sshll.u32 [#allocation5], 4
      %s27 = int_to_ptr.vmem [resolvable:$true] %s26
      %29 = dma.hbm_to_vmem [thread:$0]  %s1, 64, %s27, [#allocation6]
    $region9: #{tpu_custom_call.1} parent=1 // pred_fallthru
      _
    // Predicated region
    $region10: #{tpu_custom_call.1} parent=1 // pred_check
      _
    $region11: #{tpu_custom_call.1} parent=1 // pred_check_branch
      %31 = sbr.rel (0) target = $region13
    $region12: #{tpu_custom_call.1} parent=1 // pred_region
      %32 = dma.done [#allocation3], 128
    $region13: #{tpu_custom_call.1} parent=1 // pred_fallthru
      _
    // Predicated region
    $region14: #{tpu_custom_call.1} parent=1 // pred_check
      _
    $region15: #{tpu_custom_call.1} parent=1 // pred_check_branch
      %34 = sbr.rel (0) target = $region17
    $region16: #{tpu_custom_call.1} parent=1 // pred_region
      %35 = dma.done [#allocation6], 64
    $region17: #{tpu_custom_call.1} parent=1 // pred_fallthru
      _
    %v36 = vld [vmem:[#allocation2] sm:$0xff]
    %v37 = vmul.f32 %v36, %v36
    %v38 = vlaneseq
    %v39 = vand.u32 %v38, 127
    %vm40 = vcmp.lt.s32.totalorder %v39, 3
    %v41 = vsel %vm40, %v37, 0.0
    %vm42 = vcmask 48128
    %v43 = vsel %vm42, %v41, 0.0
    %44 = vadd.xlane.f32.xlu0 %v43
    %v45 = vpop.xlane.xlu0 %44
    %v46 = vrot.slane %v45, 4
    %v47 = vadd.f32 %v45, %v46
    %v48 = vrot.slane %v47, 2
    %v49 = vadd.f32 %v47, %v48
    %v50 = vrot.slane %v49, 1
    %v51 = vadd.f32 %v49, %v50
    %s52 = vtos %v51
    %v53 = vstv %s52
    %vm54 = vcmp.ge.s32.totalorder %v39, 3
    %v55 = vsel %vm54, %v37, 0.0
    %v56 = vsel %vm42, %v55, 0.0
    %57 = vadd.xlane.f32.xlu0 %v56
    %v58 = vpop.xlane.xlu0 %57
    %v59 = vrot.slane %v58, 4
    %v60 = vadd.f32 %v58, %v59
    %v61 = vrot.slane %v60, 2
    %v62 = vadd.f32 %v60, %v61
    %v63 = vrot.slane %v62, 1
    %v64 = vadd.f32 %v62, %v63
    %s65 = vtos %v64
    %v66 = vstv %s65
    %v67 = vrsqrt.pop %v53
    %v68 = vmul.f32 %v53, %v67
    %vm69 = vcmp.eq.f32.partialorder %v53, inf
    %v70 = vsel %vm69, %v53, %v68
    %vm71 = vcmp.eq.f32.partialorder %v53, 0.0
    %v72 = vand.u32 %v53, 2147483648
    %v73 = vsel %vm71, %v72, %v70
    %v74 = vrsqrt.pop %v66
    %v75 = vmul.f32 %v66, %v74
    %vm76 = vcmp.eq.f32.partialorder %v66, inf
    %v77 = vsel %vm76, %v66, %v75
    %vm78 = vcmp.eq.f32.partialorder %v66, 0.0
    %v79 = vand.u32 %v66, 2147483648
    %v80 = vsel %vm78, %v79, %v77
    %v81 = vld [vmem:[#allocation5] sm:$0xf]
    %vm82 = vcmask 60416
    %v83 = vsel %vm82, %v81, 0.0
    %84 = vadd.xlane.f32.xlu0 %v83
    %v85 = vpop.xlane.xlu0 %84
    %v86 = vmul.f32 %v85, 0.125
    %v87 = vlaneseq
    %v88 = vshrl.u32 %v87, 7
    %vm89 = vcmp.eq.s32.totalorder %v88, %v39
    %v90 = vsel %vm89, %v86, 0.0
    %vm91 = vcmask 1043456
    %v92 = vsel %vm91, %v90, 0.0
    %v93 = vrot.slane %v92, 4
    %v94 = vadd.f32 %v92, %v93
    %v95 = vrot.slane %v94, 2
    %v96 = vadd.f32 %v94, %v95
    %v97 = vrot.slane %v96, 1
    %v98 = vadd.f32 %v96, %v97
    %vm99 = vcmp.eq.s32.totalorder %v39, 0
    %vm100 = vcmp.eq.s32.totalorder %v39, 1
    %v101 = vsel %vm100, %v80, 0.0
    %v102 = vsel %vm99, %v73, %v101
    %vm103 = vcmp.eq.s32.totalorder %v88, 0
    %vm104 = vcmp.eq.s32.totalorder %v88, 1
    %v105 = vsel %vm104, %v98, 0.0
    %v106 = vsel %vm103, %v102, %v105
    %107 = vst [vmem:[#allocation7] sm:$0xff] %v106
    // Predicated region
    $region18: #{tpu_custom_call.1} parent=1 // pred_check
      _
    $region19: #{tpu_custom_call.1} parent=1 // pred_check_branch
      %109 = sbr.rel (0) target = $region21
    $region20: #{tpu_custom_call.1} parent=1 // pred_region
      %s111 = ssub.s32 128, 128
      %112 = vsyncadd [#allocation4], %s111
      %s114 = sshll.u32 [#allocation7], 4
      %s115 = int_to_ptr.vmem [resolvable:$true] %s114
      %117 = dma.vmem_to_hbm [thread:$0]  %s115, 128, %s2, [#allocation4]
    $region21: #{tpu_custom_call.1} parent=1 // pred_fallthru
      _
    // Predicated region
    $region22: #{tpu_custom_call.1} parent=1 // pred_check
      _
    $region23: #{tpu_custom_call.1} parent=1 // pred_check_branch
      %119 = sbr.rel (0) target = $region25
    $region24: #{tpu_custom_call.1} parent=1 // pred_region
      %120 = dma.done [#allocation4], 128
    $region25: #{tpu_custom_call.1} parent=1 // pred_fallthru
      _
    %121 = vsyncpa [#allocation3], 1
    %122 = vsyncpa [#allocation6], 1
    %123 = vsyncpa [#allocation4], 1

</llo_original>
